<compile_context>
chip_gen: v6e
topology: v6e:2x2x1
jax: 0.10.0
libtpu: 0.0.40
codegen_flags: <defaults>
</compile_context>

<pallas_src>
import functools
import math

import jax
import jax.numpy as jnp
from jax import lax
from jax.experimental import pallas as pl
from jax.experimental.pallas import tpu as pltpu

STDDEV = 0.1
_LANES = 512        # lane-dense last dim (multiple of 128)
_TILE_M_MAX = 1024  # 1024x512 f32 = 2 MiB/tile; in+out double-buffered ~ 8 MiB


def _i32(v):
    """Python int (possibly >= 2**31) -> int32 constant with the same bits."""
    v &= 0xFFFFFFFF
    if v >= 1 << 31:
        v -= 1 << 32
    return jnp.int32(v)


def _shr(x, n):
    """Logical right shift on int32 (arithmetic shift + mask of sign bits)."""
    return (x >> n) & ((1 << (32 - n)) - 1)


def _lowbias32(x):
    """32-bit integer mixer (lowbias32); multiplies wrap mod 2**32."""
    x = x ^ _shr(x, 16)
    x = x * _i32(0x7FEB352D)
    x = x ^ _shr(x, 15)
    x = x * _i32(0x846CA68B)
    x = x ^ _shr(x, 16)
    return x


def _bits_to_unit_float(bits):
    """int32 bits -> f32 in [1.0, 2.0) via mantissa trick (no int->f32 cvt)."""
    mant = _shr(bits, 9) | _i32(0x3F800000)
    return lax.bitcast_convert_type(mant, jnp.float32)


def _gaussian_noise_kernel(seed_ref, x_ref, o_ref, *, stddev):
    tile_m, lanes = x_ref.shape
    half = tile_m // 2

    # Unique global id for every Box-Muller pair handled by this tile.
    row = lax.broadcasted_iota(jnp.int32, (half, lanes), 0)
    col = lax.broadcasted_iota(jnp.int32, (half, lanes), 1)
    base = pl.program_id(0) * half
    pair_id = (base + row) * lanes + col

    key = _lowbias32(seed_ref[0] ^ _i32(0x9E3779B9))
    c = pair_id * 2
    bits1 = _lowbias32(c ^ key)
    bits2 = _lowbias32((c + 1) ^ key)

    u1 = 2.0 - _bits_to_unit_float(bits1)                              # (0, 1]
    theta = jnp.float32(2.0 * math.pi) * (_bits_to_unit_float(bits2) - 1.0)

    # stddev folded into the radius; both Box-Muller outputs are used.
    r = jnp.sqrt(jnp.float32(-2.0 * stddev * stddev) * jnp.log(u1))
    z1 = r * jnp.cos(theta)
    z2 = r * jnp.sin(theta)

    o_ref[:half, :] = (x_ref[:half, :].astype(jnp.float32) + z1).astype(o_ref.dtype)
    o_ref[half:, :] = (x_ref[half:, :].astype(jnp.float32) + z2).astype(o_ref.dtype)


def gaussian_noise(x, seed, *, stddev=STDDEV, training=True):
    """Pallas TPU implementation of GaussianNoise.forward."""
    if not training:
        return x

    orig_shape = x.shape
    total = math.prod(orig_shape) if orig_shape else 1

    rows = -(-total // _LANES)
    rows = ((rows + 15) // 16) * 16          # multiple of 16 -> aligned half-tiles
    tile_m = min(_TILE_M_MAX, rows)
    grid_m = -(-rows // tile_m)
    rows = grid_m * tile_m
    padded = rows * _LANES

    flat = x.reshape(-1)
    if padded != total:
        flat = jnp.pad(flat, (0, padded - total))
    x2d = flat.reshape(rows, _LANES)

    seed_arr = jnp.asarray([seed], dtype=jnp.int32)
    kernel = functools.partial(_gaussian_noise_kernel, stddev=float(stddev))

    out2d = pl.pallas_call(
        kernel,
        out_shape=jax.ShapeDtypeStruct(x2d.shape, x2d.dtype),
        grid=(grid_m,),
        in_specs=[
            pl.BlockSpec(memory_space=pltpu.SMEM),             # seed scalar
            pl.BlockSpec((tile_m, _LANES), lambda i: (i, 0)),  # x tile
        ],
        out_specs=pl.BlockSpec((tile_m, _LANES), lambda i: (i, 0)),
        input_output_aliases={1: 0},                            # out aliases x2d
        compiler_params=pltpu.CompilerParams(
            dimension_semantics=("parallel",)),
    )(seed_arr, x2d)

    return out2d.reshape(-1)[:total].reshape(orig_shape)


if __name__ == "__main__":
    key = jax.random.PRNGKey(0)
    # Small NCHW input consistent with the module's usage.
    x = jax.random.normal(key, (2, 4, 16, 16), dtype=jnp.float32)

    # Training path: x + N(0, stddev^2)
    y_train = jax.block_until_ready(gaussian_noise(x, seed=1234, stddev=STDDEV,
                                                   training=True))
    # Eval path: identity
    y_eval = jax.block_until_ready(gaussian_noise(x, seed=1234, stddev=STDDEV,
                                                  training=False))

    assert y_train.shape == x.shape and y_train.dtype == x.dtype
    assert bool(jnp.all(y_eval == x))

    noise = y_train - x
    est_std = float(jnp.std(noise))
    est_mean = float(jnp.mean(noise))
    assert 0.05 < est_std < 0.2, f"unexpected noise std {est_std}"
    assert abs(est_mean) < 0.03, f"unexpected noise mean {est_mean}"

    # Different seed -> different noise.
    y_other = jax.block_until_ready(gaussian_noise(x, seed=4321, stddev=STDDEV,
                                                   training=True))
    assert not bool(jnp.all(y_other == y_train))

    print("KERNEL_OK")
</pallas_src>

<mosaic_0001>
module attributes {stable_mosaic.version = 11 : i64} {
  func.func @_gaussian_noise_kernel(%arg0: i32, %arg1: memref<1xi32, #tpu.memory_space<smem>>, %arg2: memref<16x512xf32, #tpu.memory_space<vmem>>, %arg3: memref<16x512xf32, #tpu.memory_space<vmem>>) attributes {dimension_semantics = [#tpu.dimension_semantics<parallel>], iteration_bounds = array<i64: 1>, scalar_prefetch = 0 : i64, scratch_operands = 0 : i64, tpu.core_type = #tpu.core_type<tc>, window_params = [{transform_indices = @transform_0, window_bounds = array<i64: 1>}, {transform_indices = @transform_1, window_bounds = array<i64: 16, 512>}, {transform_indices = @transform_2, window_bounds = array<i64: 16, 512>}]} {
    %0 = tpu.iota {dimensions = array<i32: 0>} : vector<8x512xi32>
    %1 = tpu.iota {dimensions = array<i32: 1>} : vector<8x512xi32>
    %c8_i32 = arith.constant 8 : i32
    %2 = arith.muli %arg0, %c8_i32 : i32
    %3 = vector.broadcast %2 : i32 to vector<8x512xi32>
    %4 = arith.addi %3, %0 : vector<8x512xi32>
    %c512_i32 = arith.constant 512 : i32
    %5 = vector.broadcast %c512_i32 : i32 to vector<8x512xi32>
    %6 = arith.muli %4, %5 : vector<8x512xi32>
    %7 = arith.addi %6, %1 : vector<8x512xi32>
    %c0 = arith.constant 0 : index
    %8 = memref.load %arg1[%c0] : memref<1xi32, #tpu.memory_space<smem>>
    %c-1640531527_i32 = arith.constant -1640531527 : i32
    %9 = arith.xori %8, %c-1640531527_i32 : i32
    %c16_i32 = arith.constant 16 : i32
    %10 = arith.shrsi %9, %c16_i32 : i32
    %c65535_i32 = arith.constant 65535 : i32
    %11 = arith.andi %10, %c65535_i32 : i32
    %12 = arith.xori %9, %11 : i32
    %c2146121005_i32 = arith.constant 2146121005 : i32
    %13 = arith.muli %12, %c2146121005_i32 : i32
    %c15_i32 = arith.constant 15 : i32
    %14 = arith.shrsi %13, %c15_i32 : i32
    %c131071_i32 = arith.constant 131071 : i32
    %15 = arith.andi %14, %c131071_i32 : i32
    %16 = arith.xori %13, %15 : i32
    %c-2073254261_i32 = arith.constant -2073254261 : i32
    %17 = arith.muli %16, %c-2073254261_i32 : i32
    %c16_i32_0 = arith.constant 16 : i32
    %18 = arith.shrsi %17, %c16_i32_0 : i32
    %c65535_i32_1 = arith.constant 65535 : i32
    %19 = arith.andi %18, %c65535_i32_1 : i32
    %20 = arith.xori %17, %19 : i32
    %c2_i32 = arith.constant 2 : i32
    %21 = vector.broadcast %c2_i32 : i32 to vector<8x512xi32>
    %22 = arith.muli %7, %21 : vector<8x512xi32>
    %23 = vector.broadcast %20 : i32 to vector<8x512xi32>
    %24 = arith.xori %22, %23 : vector<8x512xi32>
    %c16_i32_2 = arith.constant 16 : i32
    %25 = vector.broadcast %c16_i32_2 : i32 to vector<8x512xi32>
    %26 = arith.shrsi %24, %25 : vector<8x512xi32>
    %c65535_i32_3 = arith.constant 65535 : i32
    %27 = vector.broadcast %c65535_i32_3 : i32 to vector<8x512xi32>
    %28 = arith.andi %26, %27 : vector<8x512xi32>
    %29 = arith.xori %24, %28 : vector<8x512xi32>
    %c2146121005_i32_4 = arith.constant 2146121005 : i32
    %30 = vector.broadcast %c2146121005_i32_4 : i32 to vector<8x512xi32>
    %31 = arith.muli %29, %30 : vector<8x512xi32>
    %c15_i32_5 = arith.constant 15 : i32
    %32 = vector.broadcast %c15_i32_5 : i32 to vector<8x512xi32>
    %33 = arith.shrsi %31, %32 : vector<8x512xi32>
    %c131071_i32_6 = arith.constant 131071 : i32
    %34 = vector.broadcast %c131071_i32_6 : i32 to vector<8x512xi32>
    %35 = arith.andi %33, %34 : vector<8x512xi32>
    %36 = arith.xori %31, %35 : vector<8x512xi32>
    %c-2073254261_i32_7 = arith.constant -2073254261 : i32
    %37 = vector.broadcast %c-2073254261_i32_7 : i32 to vector<8x512xi32>
    %38 = arith.muli %36, %37 : vector<8x512xi32>
    %c16_i32_8 = arith.constant 16 : i32
    %39 = vector.broadcast %c16_i32_8 : i32 to vector<8x512xi32>
    %40 = arith.shrsi %38, %39 : vector<8x512xi32>
    %c65535_i32_9 = arith.constant 65535 : i32
    %41 = vector.broadcast %c65535_i32_9 : i32 to vector<8x512xi32>
    %42 = arith.andi %40, %41 : vector<8x512xi32>
    %43 = arith.xori %38, %42 : vector<8x512xi32>
    %c1_i32 = arith.constant 1 : i32
    %44 = vector.broadcast %c1_i32 : i32 to vector<8x512xi32>
    %45 = arith.addi %22, %44 : vector<8x512xi32>
    %46 = vector.broadcast %20 : i32 to vector<8x512xi32>
    %47 = arith.xori %45, %46 : vector<8x512xi32>
    %c16_i32_10 = arith.constant 16 : i32
    %48 = vector.broadcast %c16_i32_10 : i32 to vector<8x512xi32>
    %49 = arith.shrsi %47, %48 : vector<8x512xi32>
    %c65535_i32_11 = arith.constant 65535 : i32
    %50 = vector.broadcast %c65535_i32_11 : i32 to vector<8x512xi32>
    %51 = arith.andi %49, %50 : vector<8x512xi32>
    %52 = arith.xori %47, %51 : vector<8x512xi32>
    %c2146121005_i32_12 = arith.constant 2146121005 : i32
    %53 = vector.broadcast %c2146121005_i32_12 : i32 to vector<8x512xi32>
    %54 = arith.muli %52, %53 : vector<8x512xi32>
    %c15_i32_13 = arith.constant 15 : i32
    %55 = vector.broadcast %c15_i32_13 : i32 to vector<8x512xi32>
    %56 = arith.shrsi %54, %55 : vector<8x512xi32>
    %c131071_i32_14 = arith.constant 131071 : i32
    %57 = vector.broadcast %c131071_i32_14 : i32 to vector<8x512xi32>
    %58 = arith.andi %56, %57 : vector<8x512xi32>
    %59 = arith.xori %54, %58 : vector<8x512xi32>
    %c-2073254261_i32_15 = arith.constant -2073254261 : i32
    %60 = vector.broadcast %c-2073254261_i32_15 : i32 to vector<8x512xi32>
    %61 = arith.muli %59, %60 : vector<8x512xi32>
    %c16_i32_16 = arith.constant 16 : i32
    %62 = vector.broadcast %c16_i32_16 : i32 to vector<8x512xi32>
    %63 = arith.shrsi %61, %62 : vector<8x512xi32>
    %c65535_i32_17 = arith.constant 65535 : i32
    %64 = vector.broadcast %c65535_i32_17 : i32 to vector<8x512xi32>
    %65 = arith.andi %63, %64 : vector<8x512xi32>
    %66 = arith.xori %61, %65 : vector<8x512xi32>
    %c9_i32 = arith.constant 9 : i32
    %67 = vector.broadcast %c9_i32 : i32 to vector<8x512xi32>
    %68 = arith.shrsi %43, %67 : vector<8x512xi32>
    %c8388607_i32 = arith.constant 8388607 : i32
    %69 = vector.broadcast %c8388607_i32 : i32 to vector<8x512xi32>
    %70 = arith.andi %68, %69 : vector<8x512xi32>
    %c1065353216_i32 = arith.constant 1065353216 : i32
    %71 = vector.broadcast %c1065353216_i32 : i32 to vector<8x512xi32>
    %72 = arith.ori %70, %71 : vector<8x512xi32>
    %73 = tpu.bitcast %72 : vector<8x512xi32> -> vector<8x512xf32>
    %cst = arith.constant 2.000000e+00 : f32
    %74 = vector.broadcast %cst : f32 to vector<8x512xf32>
    %75 = arith.subf %74, %73 : vector<8x512xf32>
    %c9_i32_18 = arith.constant 9 : i32
    %76 = vector.broadcast %c9_i32_18 : i32 to vector<8x512xi32>
    %77 = arith.shrsi %66, %76 : vector<8x512xi32>
    %c8388607_i32_19 = arith.constant 8388607 : i32
    %78 = vector.broadcast %c8388607_i32_19 : i32 to vector<8x512xi32>
    %79 = arith.andi %77, %78 : vector<8x512xi32>
    %c1065353216_i32_20 = arith.constant 1065353216 : i32
    %80 = vector.broadcast %c1065353216_i32_20 : i32 to vector<8x512xi32>
    %81 = arith.ori %79, %80 : vector<8x512xi32>
    %82 = tpu.bitcast %81 : vector<8x512xi32> -> vector<8x512xf32>
    %cst_21 = arith.constant 1.000000e+00 : f32
    %83 = vector.broadcast %cst_21 : f32 to vector<8x512xf32>
    %84 = arith.subf %82, %83 : vector<8x512xf32>
    %cst_22 = arith.constant 6.28318548 : f32
    %85 = vector.broadcast %cst_22 : f32 to vector<8x512xf32>
    %86 = arith.mulf %85, %84 : vector<8x512xf32>
    %87 = math.log %75 : vector<8x512xf32>
    %cst_23 = arith.constant -2.000000e-02 : f32
    %88 = vector.broadcast %cst_23 : f32 to vector<8x512xf32>
    %89 = arith.mulf %88, %87 : vector<8x512xf32>
    %90 = math.sqrt %89 : vector<8x512xf32>
    %91 = math.cos %86 : vector<8x512xf32>
    %92 = arith.mulf %90, %91 : vector<8x512xf32>
    %93 = math.sin %86 : vector<8x512xf32>
    %94 = arith.mulf %90, %93 : vector<8x512xf32>
    %c0_24 = arith.constant 0 : index
    %c0_25 = arith.constant 0 : index
    %95 = vector.load %arg2[%c0_24, %c0_25] : memref<16x512xf32, #tpu.memory_space<vmem>>, vector<8x512xf32>
    %96 = arith.addf %95, %92 : vector<8x512xf32>
    %c0_26 = arith.constant 0 : index
    %c0_27 = arith.constant 0 : index
    %97 = vector.load %arg3[%c0_26, %c0_27] : memref<16x512xf32, #tpu.memory_space<vmem>>, vector<8x512xf32>
    tpu.vector_store %arg3[%c0_26, %c0_27], %96 {strides = array<i32>} : memref<16x512xf32, #tpu.memory_space<vmem>>, vector<8x512xf32>,
    %c8 = arith.constant 8 : index
    %c0_28 = arith.constant 0 : index
    %98 = vector.load %arg2[%c8, %c0_28] : memref<16x512xf32, #tpu.memory_space<vmem>>, vector<8x512xf32>
    %99 = arith.addf %98, %94 : vector<8x512xf32>
    %c8_29 = arith.constant 8 : index
    %c0_30 = arith.constant 0 : index
    %100 = vector.load %arg3[%c8_29, %c0_30] : memref<16x512xf32, #tpu.memory_space<vmem>>, vector<8x512xf32>
    tpu.vector_store %arg3[%c8_29, %c0_30], %99 {strides = array<i32>} : memref<16x512xf32, #tpu.memory_space<vmem>>, vector<8x512xf32>,
    return
  }
  func.func @transform_0(%arg0: i32) -> i32 {
    %c0_i32 = arith.constant 0 : i32
    %c0_i32_0 = arith.constant 0 : i32
    return %c0_i32 : i32
  }
  func.func @transform_1(%arg0: i32) -> (i32, i32) {
    %c0_i32 = arith.constant 0 : i32
    %c0_i32_0 = arith.constant 0 : i32
    return %arg0, %c0_i32 : i32, i32
  }
  func.func @transform_2(%arg0: i32) -> (i32, i32) {
    %c0_i32 = arith.constant 0 : i32
    %c0_i32_0 = arith.constant 0 : i32
    return %arg0, %c0_i32 : i32, i32
  }
}

</mosaic_0001>

<llo_original>
// kernel: tpu_custom_call.1
$region0: #{tpu_custom_call.1}
  #allocation0 [shape = 'u32[]', space=smem, size = 0x4, offset = 0x4, fixed_abs, tag = 'smem constant byte address 0x4 - core index']
  #allocation1 [shape = 'u32[144,128]{1,0:T(1,128)}', space=vmem, size = 0x12000, scoped, tag = 'internal scratch']
  #allocation2 [shape = 's32[1]{0:T(128)S(6)}', space=smem, size = 0x200, scoped, tag = 'scoped memory for tpu_custom_call.1']
  %s0 = inlined_call_operand.<no memory space> [shape: s32[1], index: 0, kind: input, shape index: {}]
  %s1 = inlined_call_operand.hbm [shape: f32[16,512], index: 1, kind: input, shape index: {}, may-alias: {1,2}]
  %s2 = inlined_call_operand.hbm [shape: f32[16,512], index: 2, kind: output, shape index: {}, may-alias: {1,2}]
  %s3 = sld [smem:[#allocation0]]
  $region22: #{tpu_custom_call.1} parent=0
    _
  %s5 = ssub.s32 1, %s3
  %s6 = scalar_select 0, %s5, %s3
  %7 = sst [smem:[#allocation2]] %s0
  $region1: #{tpu_custom_call.1} parent=0
    #allocation3 [shape = 'u8[32768]{0}', space=vmem, size = 0x8000, scoped, tag = 'input window, operand 1, single buffered']
    #allocation4 [shape = 's32[1]{0}', space=sflag, size = 0x4, scoped, tag = 'scoped memory for tpu_custom_call.1']
    #allocation5 [shape = 's32[1]{0}', space=sflag, size = 0x4, scoped, tag = 'scoped memory for tpu_custom_call.1']
    #allocation6 [shape = 'u8[32768]{0}', space=vmem, size = 0x8000, scoped, tag = 'output window, operand 0, single buffered']
    %8 = vsyncpa [#allocation4], 0
    %9 = vsyncpa [#allocation5], 0
    // Predicated region
    $region2: #{tpu_custom_call.1} parent=1 // pred_check
      _
    $region3: #{tpu_custom_call.1} parent=1 // pred_check_branch
      %11 = sbr.rel (0) target = $region5
    $region4: #{tpu_custom_call.1} parent=1 // pred_region
      _
    $region5: #{tpu_custom_call.1} parent=1 // pred_fallthru
      _
    // Predicated region
    $region6: #{tpu_custom_call.1} parent=1 // pred_check
      _
    $region7: #{tpu_custom_call.1} parent=1 // pred_check_branch
      %13 = sbr.rel (0) target = $region9
    $region8: #{tpu_custom_call.1} parent=1 // pred_region
      %s15 = ssub.s32 1024, 1024
      %16 = vsyncadd [#allocation4], %s15
      %s17 = sshll.u32 [#allocation3], 4
      %s18 = int_to_ptr.vmem [resolvable:$true] %s17
      %23 = dma.hbm_to_vmem [thread:$0]  %s1, 1024, %s18, [#allocation4], 512, 512, 32
    $region9: #{tpu_custom_call.1} parent=1 // pred_fallthru
      _
    // Predicated region
    $region10: #{tpu_custom_call.1} parent=1 // pred_check
      _
    $region11: #{tpu_custom_call.1} parent=1 // pred_check_branch
      %25 = sbr.rel (0) target = $region13
    $region12: #{tpu_custom_call.1} parent=1 // pred_region
      %26 = dma.done [#allocation4], 1024
    $region13: #{tpu_custom_call.1} parent=1 // pred_fallthru
      _
    %v27 = vlaneseq
    %v28 = vshrl.u32 %v27, 7
    %v29 = vlaneseq
    %v30 = vand.u32 %v29, 127
    %v31 = vadd.s32 %v30, 128
    %v32 = vadd.s32 %v30, 256
    %v33 = vadd.s32 %v30, 384
    %s34 = smul.u32 0, 8
    %v35 = vstv %s34
    %v36 = vadd.s32 %v35, %v28
    %v37 = vmul.u32 %v36, 512
    %v38 = vadd.s32 %v37, %v30
    %v39 = vadd.s32 %v37, %v31
    %v40 = vadd.s32 %v37, %v32
    %v41 = vadd.s32 %v37, %v33
    %s42 = sld [smem:[#allocation2]]
    %s43 = sxor.u32 %s42, 2654435769
    %s44 = sshra.s32 %s43, 16
    %s45 = sand.u32 %s44, 65535
    %s46 = sxor.u32 %s43, %s45
    %s47 = smul.u32 %s46, 2146121005
    %s48 = sshra.s32 %s47, 15
    %s49 = sand.u32 %s48, 131071
    %s50 = sxor.u32 %s47, %s49
    %s51 = smul.u32 %s50, 2221713035
    %s52 = sshra.s32 %s51, 16
    %s53 = sand.u32 %s52, 65535
    %s54 = sxor.u32 %s51, %s53
    %v55 = vmul.u32 %v38, 2
    %v56 = vmul.u32 %v39, 2
    %v57 = vmul.u32 %v40, 2
    %v58 = vmul.u32 %v41, 2
    %v59 = vstv %s54
    %v60 = vxor.u32 %v55, %v59
    %v61 = vxor.u32 %v56, %v59
    %v62 = vxor.u32 %v57, %v59
    %v63 = vxor.u32 %v58, %v59
    %v64 = vshra.s32 %v60, 16
    %v65 = vshra.s32 %v61, 16
    %v66 = vshra.s32 %v62, 16
    %v67 = vshra.s32 %v63, 16
    %v68 = vand.u32 %v64, 65535
    %v69 = vand.u32 %v65, 65535
    %v70 = vand.u32 %v66, 65535
    %v71 = vand.u32 %v67, 65535
    %v72 = vxor.u32 %v60, %v68
    %v73 = vxor.u32 %v61, %v69
    %v74 = vxor.u32 %v62, %v70
    %v75 = vxor.u32 %v63, %v71
    %v76 = vmul.u32 %v72, 2146121005
    %v77 = vmul.u32 %v73, 2146121005
    %v78 = vmul.u32 %v74, 2146121005
    %v79 = vmul.u32 %v75, 2146121005
    %v80 = vshra.s32 %v76, 15
    %v81 = vshra.s32 %v77, 15
    %v82 = vshra.s32 %v78, 15
    %v83 = vshra.s32 %v79, 15
    %v84 = vand.u32 %v80, 131071
    %v85 = vand.u32 %v81, 131071
    %v86 = vand.u32 %v82, 131071
    %v87 = vand.u32 %v83, 131071
    %v88 = vxor.u32 %v76, %v84
    %v89 = vxor.u32 %v77, %v85
    %v90 = vxor.u32 %v78, %v86
    %v91 = vxor.u32 %v79, %v87
    %v92 = vmul.u32 %v88, 2221713035
    %v93 = vmul.u32 %v89, 2221713035
    %v94 = vmul.u32 %v90, 2221713035
    %v95 = vmul.u32 %v91, 2221713035
    %v96 = vshra.s32 %v92, 16
    %v97 = vshra.s32 %v93, 16
    %v98 = vshra.s32 %v94, 16
    %v99 = vshra.s32 %v95, 16
    %v100 = vand.u32 %v96, 65535
    %v101 = vand.u32 %v97, 65535
    %v102 = vand.u32 %v98, 65535
    %v103 = vand.u32 %v99, 65535
    %v104 = vxor.u32 %v92, %v100
    %v105 = vxor.u32 %v93, %v101
    %v106 = vxor.u32 %v94, %v102
    %v107 = vxor.u32 %v95, %v103
    %v108 = vadd.s32 %v55, 1
    %v109 = vadd.s32 %v56, 1
    %v110 = vadd.s32 %v57, 1
    %v111 = vadd.s32 %v58, 1
    %v112 = vxor.u32 %v108, %v59
    %v113 = vxor.u32 %v109, %v59
    %v114 = vxor.u32 %v110, %v59
    %v115 = vxor.u32 %v111, %v59
    %v116 = vshra.s32 %v112, 16
    %v117 = vshra.s32 %v113, 16
    %v118 = vshra.s32 %v114, 16
    %v119 = vshra.s32 %v115, 16
    %v120 = vand.u32 %v116, 65535
    %v121 = vand.u32 %v117, 65535
    %v122 = vand.u32 %v118, 65535
    %v123 = vand.u32 %v119, 65535
    %v124 = vxor.u32 %v112, %v120
    %v125 = vxor.u32 %v113, %v121
    %v126 = vxor.u32 %v114, %v122
    %v127 = vxor.u32 %v115, %v123
    %v128 = vmul.u32 %v124, 2146121005
    %v129 = vmul.u32 %v125, 2146121005
    %v130 = vmul.u32 %v126, 2146121005
    %v131 = vmul.u32 %v127, 2146121005
    %v132 = vshra.s32 %v128, 15
    %v133 = vshra.s32 %v129, 15
    %v134 = vshra.s32 %v130, 15
    %v135 = vshra.s32 %v131, 15
    %v136 = vand.u32 %v132, 131071
    %v137 = vand.u32 %v133, 131071
    %v138 = vand.u32 %v134, 131071
    %v139 = vand.u32 %v135, 131071
    %v140 = vxor.u32 %v128, %v136
    %v141 = vxor.u32 %v129, %v137
    %v142 = vxor.u32 %v130, %v138
    %v143 = vxor.u32 %v131, %v139
    %v144 = vmul.u32 %v140, 2221713035
    %v145 = vmul.u32 %v141, 2221713035
    %v146 = vmul.u32 %v142, 2221713035
    %v147 = vmul.u32 %v143, 2221713035
    %v148 = vshra.s32 %v144, 16
    %v149 = vshra.s32 %v145, 16
    %v150 = vshra.s32 %v146, 16
    %v151 = vshra.s32 %v147, 16
    %v152 = vand.u32 %v148, 65535
    %v153 = vand.u32 %v149, 65535
    %v154 = vand.u32 %v150, 65535
    %v155 = vand.u32 %v151, 65535
    %v156 = vxor.u32 %v144, %v152
    %v157 = vxor.u32 %v145, %v153
    %v158 = vxor.u32 %v146, %v154
    %v159 = vxor.u32 %v147, %v155
    %v160 = vshra.s32 %v104, 9
    %v161 = vshra.s32 %v105, 9
    %v162 = vshra.s32 %v106, 9
    %v163 = vshra.s32 %v107, 9
    %v164 = vand.u32 %v160, 8388607
    %v165 = vand.u32 %v161, 8388607
    %v166 = vand.u32 %v162, 8388607
    %v167 = vand.u32 %v163, 8388607
    %v168 = vor.u32 %v164, 1065353216
    %v169 = vor.u32 %v165, 1065353216
    %v170 = vor.u32 %v166, 1065353216
    %v171 = vor.u32 %v167, 1065353216
    %v176 = vsub.f32 2.0, %v168
    %v177 = vsub.f32 2.0, %v169
    %v178 = vsub.f32 2.0, %v170
    %v179 = vsub.f32 2.0, %v171
    %v180 = vshra.s32 %v156, 9
    %v181 = vshra.s32 %v157, 9
    %v182 = vshra.s32 %v158, 9
    %v183 = vshra.s32 %v159, 9
    %v184 = vand.u32 %v180, 8388607
    %v185 = vand.u32 %v181, 8388607
    %v186 = vand.u32 %v182, 8388607
    %v187 = vand.u32 %v183, 8388607
    %v188 = vor.u32 %v184, 1065353216
    %v189 = vor.u32 %v185, 1065353216
    %v190 = vor.u32 %v186, 1065353216
    %v191 = vor.u32 %v187, 1065353216
    %v196 = vsub.f32 %v188, 1.0
    %v197 = vsub.f32 %v189, 1.0
    %v198 = vsub.f32 %v190, 1.0
    %v199 = vsub.f32 %v191, 1.0
    %v200 = vmul.f32 %v196, 6.2831855
    %v201 = vmul.f32 %v197, 6.2831855
    %v202 = vmul.f32 %v198, 6.2831855
    %v203 = vmul.f32 %v199, 6.2831855
    %v204 = vlog2.pop %v176
    %v205 = vmul.f32 %v204, 0.6931472
    %v206 = vlog2.pop %v177
    %v207 = vmul.f32 %v206, 0.6931472
    %v208 = vlog2.pop %v178
    %v209 = vmul.f32 %v208, 0.6931472
    %v210 = vlog2.pop %v179
    %v211 = vmul.f32 %v210, 0.6931472
    %v212 = vmul.f32 %v205, -0.02
    %v213 = vmul.f32 %v207, -0.02
    %v214 = vmul.f32 %v209, -0.02
    %v215 = vmul.f32 %v211, -0.02
    %v216 = vrsqrt.pop %v212
    %v217 = vmul.f32 %v212, %v216
    %vm218 = vcmp.eq.f32.partialorder %v212, inf
    %v219 = vsel %vm218, %v212, %v217
    %vm220 = vcmp.eq.f32.partialorder %v212, 0.0
    %v221 = vand.u32 %v212, 2147483648
    %v222 = vsel %vm220, %v221, %v219
    %v223 = vrsqrt.pop %v213
    %v224 = vmul.f32 %v213, %v223
    %vm225 = vcmp.eq.f32.partialorder %v213, inf
    %v226 = vsel %vm225, %v213, %v224
    %vm227 = vcmp.eq.f32.partialorder %v213, 0.0
    %v228 = vand.u32 %v213, 2147483648
    %v229 = vsel %vm227, %v228, %v226
    %v230 = vrsqrt.pop %v214
    %v231 = vmul.f32 %v214, %v230
    %vm232 = vcmp.eq.f32.partialorder %v214, inf
    %v233 = vsel %vm232, %v214, %v231
    %vm234 = vcmp.eq.f32.partialorder %v214, 0.0
    %v235 = vand.u32 %v214, 2147483648
    %v236 = vsel %vm234, %v235, %v233
    %v237 = vrsqrt.pop %v215
    %v238 = vmul.f32 %v215, %v237
    %vm239 = vcmp.eq.f32.partialorder %v215, inf
    %v240 = vsel %vm239, %v215, %v238
    %vm241 = vcmp.eq.f32.partialorder %v215, 0.0
    %v242 = vand.u32 %v215, 2147483648
    %v243 = vsel %vm241, %v242, %v240
    %v244 = vand.u32 2147483647, %v200
    %vm245 = vcmp.le.f32.partialorder %v244, 0.7853982
    %vm246 = vcmp.lt.s32.totalorder %v200, 0
    %v247 = vand.u32 %v200, 2139095040
    %v248 = vshrl.u32 %v247, 23
    %v249 = vsub.s32 %v248, 127
    %v250 = vand.u32 2147483647, %v200
    %v251 = vand.u32 %v250, 8388607
    %v252 = vor.u32 %v251, 8388608
    %v253 = vsub.s32 0, %v252
    %v254 = vadd.s32 %v249, 1
    %vm255 = vcmp.gt.s32.totalorder %v254, 0
    %v256 = vsel %vm255, %v254, 0
    %v257 = vshrl.u32 %v256, 5
    %v258 = vand.u32 %v256, 31
    %v259 = vsub.s32 32, %v258
    %v260 = vshrl.u32 683565275, %v259
    %v261 = vshll.u32 683565275, %v258
    %v262 = vshrl.u32 2475754826, %v259
    %v263 = vor.u32 %v261, %v262
    %v264 = vshll.u32 2475754826, %v258
    %v265 = vshrl.u32 2131351028, %v259
    %v266 = vor.u32 %v264, %v265
    %v267 = vshll.u32 2131351028, %v258
    %v268 = vshrl.u32 2102212464, %v259
    %v269 = vor.u32 %v267, %v268
    %v270 = vshll.u32 2102212464, %v258
    %v271 = vshrl.u32 920167782, %v259
    %v272 = vor.u32 %v270, %v271
    %v273 = vshll.u32 920167782, %v258
    %v274 = vshrl.u32 1326507024, %v259
    %v275 = vor.u32 %v273, %v274
    %vm276 = vcmp.lt.s32.totalorder %v257, 1
    %vm277 = vcmp.lt.s32.totalorder %v257, 2
    %vm278 = vcmp.lt.s32.totalorder %v257, 3
    %vm279 = vcmp.lt.s32.totalorder %v257, 4
    %v280 = vsel %vm276, %v260, %v263
    %v281 = vsel %vm279, %v269, 2102212464
    %v282 = vsel %vm278, %v266, %v281
    %v283 = vsel %vm277, %v280, %v282
    %v284 = vsel %vm276, %v263, %v266
    %v285 = vsel %vm279, %v272, 920167782
    %v286 = vsel %vm278, %v269, %v285
    %v287 = vsel %vm277, %v284, %v286
    %v288 = vsel %vm276, %v266, %v269
    %v289 = vsel %vm279, %v275, 1326507024
    %v290 = vsel %vm278, %v272, %v289
    %v291 = vsel %vm277, %v288, %v290
    %v292 = vshll.u32 %v252, 8
    %v293 = vmul.u32.u64.compose %v292, %v291
    %v294 = vextract.low.u32 %v293
    %v295 = vextract.high.u32 %v293
    %v296 = vmul.u32.u64.compose %v292, %v287
    %v297 = vextract.low.u32 %v296
    %v298 = vextract.high.u32 %v296
    %v299 = vmul.u32 %v292, %v283
    %v300 = vadd.s32 %v295, %v297
    %vm301 = vc.u32 %v295, %v297
    %v302 = vadd.s32 %v298, 1
    %v303 = vsel %vm301, %v302, %v298
    %v304 = vadd.s32 %v299, %v303
    %v305 = vadd.s32 %v304, 536870912
    %v306 = vshrl.u32 %v305, 30
    %v307 = vshll.u32 %v306, 30
    %v308 = vsub.s32 %v304, %v307
    %vm309 = vcmp.lt.s32.totalorder %v308, 0
    %v310 = vsub.s32 0, %v308
    %v311 = vsel %vm309, %v310, %v308
    %v312 = vclz %v311
    %v313 = vsub.s32 %v312, 2
    %vm314 = vcmp.gt.s32.totalorder 0, %v313
    %v315 = vsel %vm314, 0, %v313
    %v316 = vsub.s32 32, %v315
    %v317 = vshll.u32 %v308, %v315
    %v318 = vshrl.u32 %v300, %v316
    %v319 = vor.u32 %v317, %v318
    %v320 = vsub.s32 4294967266, %v315
    %v321 = vadd.s32 %v320, 127
    %v322 = vshll.u32 %v321, 23
    %v323 = vor.u32 4788187, %v322
    %v324 = vand.u32 2147483647, %v323
    %v326 = vcvt.s32.f32 %v319
    %v327 = vmul.f32 %v326, %v324
    %v328 = vxor.u32 %v327, 2147483648
    %v329 = vsel %vm246, %v328, %v327
    %v330 = vsub.s32 4, %v306
    %v331 = vsel %vm246, %v330, %v306
    %v332 = vsel %vm245, %v200, %v329
    %v333 = vsel %vm245, 0, %v331
    %v334 = vcosq.f32.pop %v332
    %v335 = vsinq.f32.pop %v332
    %vm336 = vweird.f32 %v200
    %v337 = vand.u32 %v333, 3
    %vm338 = vcmp.lt.s32.totalorder %v337, 2
    %vm339 = vcmp.eq.s32.totalorder %v337, 0
    %v340 = vxor.u32 %v335, 2147483648
    %v341 = vsel %vm339, %v334, %v340
    %vm342 = vcmp.eq.s32.totalorder %v337, 2
    %v343 = vxor.u32 %v334, 2147483648
    %v344 = vsel %vm342, %v343, %v335
    %v345 = vsel %vm338, %v341, %v344
    %v346 = vsel %vm336, nan, %v345
    %v347 = vand.u32 2147483647, %v201
    %vm348 = vcmp.le.f32.partialorder %v347, 0.7853982
    %vm349 = vcmp.lt.s32.totalorder %v201, 0
    %v350 = vand.u32 %v201, 2139095040
    %v351 = vshrl.u32 %v350, 23
    %v352 = vsub.s32 %v351, 127
    %v353 = vand.u32 2147483647, %v201
    %v354 = vand.u32 %v353, 8388607
    %v355 = vor.u32 %v354, 8388608
    %v356 = vsub.s32 0, %v355
    %v357 = vadd.s32 %v352, 1
    %vm358 = vcmp.gt.s32.totalorder %v357, 0
    %v359 = vsel %vm358, %v357, 0
    %v360 = vshrl.u32 %v359, 5
    %v361 = vand.u32 %v359, 31
    %v362 = vsub.s32 32, %v361
    %v363 = vshrl.u32 683565275, %v362
    %v364 = vshll.u32 683565275, %v361
    %v365 = vshrl.u32 2475754826, %v362
    %v366 = vor.u32 %v364, %v365
    %v367 = vshll.u32 2475754826, %v361
    %v368 = vshrl.u32 2131351028, %v362
    %v369 = vor.u32 %v367, %v368
    %v370 = vshll.u32 2131351028, %v361
    %v371 = vshrl.u32 2102212464, %v362
    %v372 = vor.u32 %v370, %v371
    %v373 = vshll.u32 2102212464, %v361
    %v374 = vshrl.u32 920167782, %v362
    %v375 = vor.u32 %v373, %v374
    %v376 = vshll.u32 920167782, %v361
    %v377 = vshrl.u32 1326507024, %v362
    %v378 = vor.u32 %v376, %v377
    %vm379 = vcmp.lt.s32.totalorder %v360, 1
    %vm380 = vcmp.lt.s32.totalorder %v360, 2
    %vm381 = vcmp.lt.s32.totalorder %v360, 3
    %vm382 = vcmp.lt.s32.totalorder %v360, 4
    %v383 = vsel %vm379, %v363, %v366
    %v384 = vsel %vm382, %v372, 2102212464
    %v385 = vsel %vm381, %v369, %v384
    %v386 = vsel %vm380, %v383, %v385
    %v387 = vsel %vm379, %v366, %v369
    %v388 = vsel %vm382, %v375, 920167782
    %v389 = vsel %vm381, %v372, %v388
    %v390 = vsel %vm380, %v387, %v389
    %v391 = vsel %vm379, %v369, %v372
    %v392 = vsel %vm382, %v378, 1326507024
    %v393 = vsel %vm381, %v375, %v392
    %v394 = vsel %vm380, %v391, %v393
    %v395 = vshll.u32 %v355, 8
    %v396 = vmul.u32.u64.compose %v395, %v394
    %v397 = vextract.low.u32 %v396
    %v398 = vextract.high.u32 %v396
    %v399 = vmul.u32.u64.compose %v395, %v390
    %v400 = vextract.low.u32 %v399
    %v401 = vextract.high.u32 %v399
    %v402 = vmul.u32 %v395, %v386
    %v403 = vadd.s32 %v398, %v400
    %vm404 = vc.u32 %v398, %v400
    %v405 = vadd.s32 %v401, 1
    %v406 = vsel %vm404, %v405, %v401
    %v407 = vadd.s32 %v402, %v406
    %v408 = vadd.s32 %v407, 536870912
    %v409 = vshrl.u32 %v408, 30
    %v410 = vshll.u32 %v409, 30
    %v411 = vsub.s32 %v407, %v410
    %vm412 = vcmp.lt.s32.totalorder %v411, 0
    %v413 = vsub.s32 0, %v411
    %v414 = vsel %vm412, %v413, %v411
    %v415 = vclz %v414
    %v416 = vsub.s32 %v415, 2
    %vm417 = vcmp.gt.s32.totalorder 0, %v416
    %v418 = vsel %vm417, 0, %v416
    %v419 = vsub.s32 32, %v418
    %v420 = vshll.u32 %v411, %v418
    %v421 = vshrl.u32 %v403, %v419
    %v422 = vor.u32 %v420, %v421
    %v423 = vsub.s32 4294967266, %v418
    %v424 = vadd.s32 %v423, 127
    %v425 = vshll.u32 %v424, 23
    %v426 = vor.u32 4788187, %v425
    %v427 = vand.u32 2147483647, %v426
    %v429 = vcvt.s32.f32 %v422
    %v430 = vmul.f32 %v429, %v427
    %v431 = vxor.u32 %v430, 2147483648
    %v432 = vsel %vm349, %v431, %v430
    %v433 = vsub.s32 4, %v409
    %v434 = vsel %vm349, %v433, %v409
    %v435 = vsel %vm348, %v201, %v432
    %v436 = vsel %vm348, 0, %v434
    %v437 = vcosq.f32.pop %v435
    %v438 = vsinq.f32.pop %v435
    %vm439 = vweird.f32 %v201
    %v440 = vand.u32 %v436, 3
    %vm441 = vcmp.lt.s32.totalorder %v440, 2
    %vm442 = vcmp.eq.s32.totalorder %v440, 0
    %v443 = vxor.u32 %v438, 2147483648
    %v444 = vsel %vm442, %v437, %v443
    %vm445 = vcmp.eq.s32.totalorder %v440, 2
    %v446 = vxor.u32 %v437, 2147483648
    %v447 = vsel %vm445, %v446, %v438
    %v448 = vsel %vm441, %v444, %v447
    %v449 = vsel %vm439, nan, %v448
    %v450 = vand.u32 2147483647, %v202
    %vm451 = vcmp.le.f32.partialorder %v450, 0.7853982
    %vm452 = vcmp.lt.s32.totalorder %v202, 0
    %v453 = vand.u32 %v202, 2139095040
    %v454 = vshrl.u32 %v453, 23
    %v455 = vsub.s32 %v454, 127
    %v456 = vand.u32 2147483647, %v202
    %v457 = vand.u32 %v456, 8388607
    %v458 = vor.u32 %v457, 8388608
    %v459 = vsub.s32 0, %v458
    %v460 = vadd.s32 %v455, 1
    %vm461 = vcmp.gt.s32.totalorder %v460, 0
    %v462 = vsel %vm461, %v460, 0
    %v463 = vshrl.u32 %v462, 5
    %v464 = vand.u32 %v462, 31
    %v465 = vsub.s32 32, %v464
    %v466 = vshrl.u32 683565275, %v465
    %v467 = vshll.u32 683565275, %v464
    %v468 = vshrl.u32 2475754826, %v465
    %v469 = vor.u32 %v467, %v468
    %v470 = vshll.u32 2475754826, %v464
    %v471 = vshrl.u32 2131351028, %v465
    %v472 = vor.u32 %v470, %v471
    %v473 = vshll.u32 2131351028, %v464
    %v474 = vshrl.u32 2102212464, %v465
    %v475 = vor.u32 %v473, %v474
    %v476 = vshll.u32 2102212464, %v464
    %v477 = vshrl.u32 920167782, %v465
    %v478 = vor.u32 %v476, %v477
    %v479 = vshll.u32 920167782, %v464
    %v480 = vshrl.u32 1326507024, %v465
    %v481 = vor.u32 %v479, %v480
    %vm482 = vcmp.lt.s32.totalorder %v463, 1
    %vm483 = vcmp.lt.s32.totalorder %v463, 2
    %vm484 = vcmp.lt.s32.totalorder %v463, 3
    %vm485 = vcmp.lt.s32.totalorder %v463, 4
    %v486 = vsel %vm482, %v466, %v469
    %v487 = vsel %vm485, %v475, 2102212464
    %v488 = vsel %vm484, %v472, %v487
    %v489 = vsel %vm483, %v486, %v488
    %v490 = vsel %vm482, %v469, %v472
    %v491 = vsel %vm485, %v478, 920167782
    %v492 = vsel %vm484, %v475, %v491
    %v493 = vsel %vm483, %v490, %v492
    %v494 = vsel %vm482, %v472, %v475
    %v495 = vsel %vm485, %v481, 1326507024
    %v496 = vsel %vm484, %v478, %v495
    %v497 = vsel %vm483, %v494, %v496
    %v498 = vshll.u32 %v458, 8
    %v499 = vmul.u32.u64.compose %v498, %v497
    %v500 = vextract.low.u32 %v499
    %v501 = vextract.high.u32 %v499
    %v502 = vmul.u32.u64.compose %v498, %v493
    %v503 = vextract.low.u32 %v502
    %v504 = vextract.high.u32 %v502
    %v505 = vmul.u32 %v498, %v489
    %v506 = vadd.s32 %v501, %v503
    %vm507 = vc.u32 %v501, %v503
    %v508 = vadd.s32 %v504, 1
    %v509 = vsel %vm507, %v508, %v504
    %v510 = vadd.s32 %v505, %v509
    %v511 = vadd.s32 %v510, 536870912
    %v512 = vshrl.u32 %v511, 30
    %v513 = vshll.u32 %v512, 30
    %v514 = vsub.s32 %v510, %v513
    %vm515 = vcmp.lt.s32.totalorder %v514, 0
    %v516 = vsub.s32 0, %v514
    %v517 = vsel %vm515, %v516, %v514
    %v518 = vclz %v517
    %v519 = vsub.s32 %v518, 2
    %vm520 = vcmp.gt.s32.totalorder 0, %v519
    %v521 = vsel %vm520, 0, %v519
    %v522 = vsub.s32 32, %v521
    %v523 = vshll.u32 %v514, %v521
    %v524 = vshrl.u32 %v506, %v522
    %v525 = vor.u32 %v523, %v524
    %v526 = vsub.s32 4294967266, %v521
    %v527 = vadd.s32 %v526, 127
    %v528 = vshll.u32 %v527, 23
    %v529 = vor.u32 4788187, %v528
    %v530 = vand.u32 2147483647, %v529
    %v532 = vcvt.s32.f32 %v525
    %v533 = vmul.f32 %v532, %v530
    %v534 = vxor.u32 %v533, 2147483648
    %v535 = vsel %vm452, %v534, %v533
    %v536 = vsub.s32 4, %v512
    %v537 = vsel %vm452, %v536, %v512
    %v538 = vsel %vm451, %v202, %v535
    %v539 = vsel %vm451, 0, %v537
    %v540 = vcosq.f32.pop %v538
    %v541 = vsinq.f32.pop %v538
    %vm542 = vweird.f32 %v202
    %v543 = vand.u32 %v539, 3
    %vm544 = vcmp.lt.s32.totalorder %v543, 2
    %vm545 = vcmp.eq.s32.totalorder %v543, 0
    %v546 = vxor.u32 %v541, 2147483648
    %v547 = vsel %vm545, %v540, %v546
    %vm548 = vcmp.eq.s32.totalorder %v543, 2
    %v549 = vxor.u32 %v540, 2147483648
    %v550 = vsel %vm548, %v549, %v541
    %v551 = vsel %vm544, %v547, %v550
    %v552 = vsel %vm542, nan, %v551
    %v553 = vand.u32 2147483647, %v203
    %vm554 = vcmp.le.f32.partialorder %v553, 0.7853982
    %vm555 = vcmp.lt.s32.totalorder %v203, 0
    %v556 = vand.u32 %v203, 2139095040
    %v557 = vshrl.u32 %v556, 23
    %v558 = vsub.s32 %v557, 127
    %v559 = vand.u32 2147483647, %v203
    %v560 = vand.u32 %v559, 8388607
    %v561 = vor.u32 %v560, 8388608
    %v562 = vsub.s32 0, %v561
    %v563 = vadd.s32 %v558, 1
    %vm564 = vcmp.gt.s32.totalorder %v563, 0
    %v565 = vsel %vm564, %v563, 0
    %v566 = vshrl.u32 %v565, 5
    %v567 = vand.u32 %v565, 31
    %v568 = vsub.s32 32, %v567
    %v569 = vshrl.u32 683565275, %v568
    %v570 = vshll.u32 683565275, %v567
    %v571 = vshrl.u32 2475754826, %v568
    %v572 = vor.u32 %v570, %v571
    %v573 = vshll.u32 2475754826, %v567
    %v574 = vshrl.u32 2131351028, %v568
    %v575 = vor.u32 %v573, %v574
    %v576 = vshll.u32 2131351028, %v567
    %v577 = vshrl.u32 2102212464, %v568
    %v578 = vor.u32 %v576, %v577
    %v579 = vshll.u32 2102212464, %v567
    %v580 = vshrl.u32 920167782, %v568
    %v581 = vor.u32 %v579, %v580
    %v582 = vshll.u32 920167782, %v567
    %v583 = vshrl.u32 1326507024, %v568
    %v584 = vor.u32 %v582, %v583
    %vm585 = vcmp.lt.s32.totalorder %v566, 1
    %vm586 = vcmp.lt.s32.totalorder %v566, 2
    %vm587 = vcmp.lt.s32.totalorder %v566, 3
    %vm588 = vcmp.lt.s32.totalorder %v566, 4
    %v589 = vsel %vm585, %v569, %v572
    %v590 = vsel %vm588, %v578, 2102212464
    %v591 = vsel %vm587, %v575, %v590
    %v592 = vsel %vm586, %v589, %v591
    %v593 = vsel %vm585, %v572, %v575
    %v594 = vsel %vm588, %v581, 920167782
    %v595 = vsel %vm587, %v578, %v594
    %v596 = vsel %vm586, %v593, %v595
    %v597 = vsel %vm585, %v575, %v578
    %v598 = vsel %vm588, %v584, 1326507024
    %v599 = vsel %vm587, %v581, %v598
    %v600 = vsel %vm586, %v597, %v599
    %v601 = vshll.u32 %v561, 8
    %v602 = vmul.u32.u64.compose %v601, %v600
    %v603 = vextract.low.u32 %v602
    %v604 = vextract.high.u32 %v602
    %v605 = vmul.u32.u64.compose %v601, %v596
    %v606 = vextract.low.u32 %v605
    %v607 = vextract.high.u32 %v605
    %v608 = vmul.u32 %v601, %v592
    %v609 = vadd.s32 %v604, %v606
    %vm610 = vc.u32 %v604, %v606
    %v611 = vadd.s32 %v607, 1
    %v612 = vsel %vm610, %v611, %v607
    %v613 = vadd.s32 %v608, %v612
    %v614 = vadd.s32 %v613, 536870912
    %v615 = vshrl.u32 %v614, 30
    %v616 = vshll.u32 %v615, 30
    %v617 = vsub.s32 %v613, %v616
    %vm618 = vcmp.lt.s32.totalorder %v617, 0
    %v619 = vsub.s32 0, %v617
    %v620 = vsel %vm618, %v619, %v617
    %v621 = vclz %v620
    %v622 = vsub.s32 %v621, 2
    %vm623 = vcmp.gt.s32.totalorder 0, %v622
    %v624 = vsel %vm623, 0, %v622
    %v625 = vsub.s32 32, %v624
    %v626 = vshll.u32 %v617, %v624
    %v627 = vshrl.u32 %v609, %v625
    %v628 = vor.u32 %v626, %v627
    %v629 = vsub.s32 4294967266, %v624
    %v630 = vadd.s32 %v629, 127
    %v631 = vshll.u32 %v630, 23
    %v632 = vor.u32 4788187, %v631
    %v633 = vand.u32 2147483647, %v632
    %v635 = vcvt.s32.f32 %v628
    %v636 = vmul.f32 %v635, %v633
    %v637 = vxor.u32 %v636, 2147483648
    %v638 = vsel %vm555, %v637, %v636
    %v639 = vsub.s32 4, %v615
    %v640 = vsel %vm555, %v639, %v615
    %v641 = vsel %vm554, %v203, %v638
    %v642 = vsel %vm554, 0, %v640
    %v643 = vcosq.f32.pop %v641
    %v644 = vsinq.f32.pop %v641
    %vm645 = vweird.f32 %v203
    %v646 = vand.u32 %v642, 3
    %vm647 = vcmp.lt.s32.totalorder %v646, 2
    %vm648 = vcmp.eq.s32.totalorder %v646, 0
    %v649 = vxor.u32 %v644, 2147483648
    %v650 = vsel %vm648, %v643, %v649
    %vm651 = vcmp.eq.s32.totalorder %v646, 2
    %v652 = vxor.u32 %v643, 2147483648
    %v653 = vsel %vm651, %v652, %v644
    %v654 = vsel %vm647, %v650, %v653
    %v655 = vsel %vm645, nan, %v654
    %v656 = vmul.f32 %v222, %v346
    %v657 = vmul.f32 %v229, %v449
    %v658 = vmul.f32 %v236, %v552
    %v659 = vmul.f32 %v243, %v655
    %v660 = vand.u32 2147483647, %v200
    %vm661 = vcmp.le.f32.partialorder %v660, 0.7853982
    %vm662 = vcmp.lt.s32.totalorder %v200, 0
    %v663 = vand.u32 %v200, 2139095040
    %v664 = vshrl.u32 %v663, 23
    %v665 = vsub.s32 %v664, 127
    %v666 = vand.u32 2147483647, %v200
    %v667 = vand.u32 %v666, 8388607
    %v668 = vor.u32 %v667, 8388608
    %v669 = vsub.s32 0, %v668
    %v670 = vadd.s32 %v665, 1
    %vm671 = vcmp.gt.s32.totalorder %v670, 0
    %v672 = vsel %vm671, %v670, 0
    %v673 = vshrl.u32 %v672, 5
    %v674 = vand.u32 %v672, 31
    %v675 = vsub.s32 32, %v674
    %v676 = vshrl.u32 683565275, %v675
    %v677 = vshll.u32 683565275, %v674
    %v678 = vshrl.u32 2475754826, %v675
    %v679 = vor.u32 %v677, %v678
    %v680 = vshll.u32 2475754826, %v674
    %v681 = vshrl.u32 2131351028, %v675
    %v682 = vor.u32 %v680, %v681
    %v683 = vshll.u32 2131351028, %v674
    %v684 = vshrl.u32 2102212464, %v675
    %v685 = vor.u32 %v683, %v684
    %v686 = vshll.u32 2102212464, %v674
    %v687 = vshrl.u32 920167782, %v675
    %v688 = vor.u32 %v686, %v687
    %v689 = vshll.u32 920167782, %v674
    %v690 = vshrl.u32 1326507024, %v675
    %v691 = vor.u32 %v689, %v690
    %vm692 = vcmp.lt.s32.totalorder %v673, 1
    %vm693 = vcmp.lt.s32.totalorder %v673, 2
    %vm694 = vcmp.lt.s32.totalorder %v673, 3
    %vm695 = vcmp.lt.s32.totalorder %v673, 4
    %v696 = vsel %vm692, %v676, %v679
    %v697 = vsel %vm695, %v685, 2102212464
    %v698 = vsel %vm694, %v682, %v697
    %v699 = vsel %vm693, %v696, %v698
    %v700 = vsel %vm692, %v679, %v682
    %v701 = vsel %vm695, %v688, 920167782
    %v702 = vsel %vm694, %v685, %v701
    %v703 = vsel %vm693, %v700, %v702
    %v704 = vsel %vm692, %v682, %v685
    %v705 = vsel %vm695, %v691, 1326507024
    %v706 = vsel %vm694, %v688, %v705
    %v707 = vsel %vm693, %v704, %v706
    %v708 = vshll.u32 %v668, 8
    %v709 = vmul.u32.u64.compose %v708, %v707
    %v710 = vextract.low.u32 %v709
    %v711 = vextract.high.u32 %v709
    %v712 = vmul.u32.u64.compose %v708, %v703
    %v713 = vextract.low.u32 %v712
    %v714 = vextract.high.u32 %v712
    %v715 = vmul.u32 %v708, %v699
    %v716 = vadd.s32 %v711, %v713
    %vm717 = vc.u32 %v711, %v713
    %v718 = vadd.s32 %v714, 1
    %v719 = vsel %vm717, %v718, %v714
    %v720 = vadd.s32 %v715, %v719
    %v721 = vadd.s32 %v720, 536870912
    %v722 = vshrl.u32 %v721, 30
    %v723 = vshll.u32 %v722, 30
    %v724 = vsub.s32 %v720, %v723
    %vm725 = vcmp.lt.s32.totalorder %v724, 0
    %v726 = vsub.s32 0, %v724
    %v727 = vsel %vm725, %v726, %v724
    %v728 = vclz %v727
    %v729 = vsub.s32 %v728, 2
    %vm730 = vcmp.gt.s32.totalorder 0, %v729
    %v731 = vsel %vm730, 0, %v729
    %v732 = vsub.s32 32, %v731
    %v733 = vshll.u32 %v724, %v731
    %v734 = vshrl.u32 %v716, %v732
    %v735 = vor.u32 %v733, %v734
    %v736 = vsub.s32 4294967266, %v731
    %v737 = vadd.s32 %v736, 127
    %v738 = vshll.u32 %v737, 23
    %v739 = vor.u32 4788187, %v738
    %v740 = vand.u32 2147483647, %v739
    %v742 = vcvt.s32.f32 %v735
    %v743 = vmul.f32 %v742, %v740
    %v744 = vxor.u32 %v743, 2147483648
    %v745 = vsel %vm662, %v744, %v743
    %v746 = vsub.s32 4, %v722
    %v747 = vsel %vm662, %v746, %v722
    %v748 = vsel %vm661, %v200, %v745
    %v749 = vsel %vm661, 0, %v747
    %v750 = vcosq.f32.pop %v748
    %v751 = vsinq.f32.pop %v748
    %vm752 = vweird.f32 %v200
    %v753 = vadd.s32 %v749, 3
    %v754 = vand.u32 %v753, 3
    %vm755 = vcmp.lt.s32.totalorder %v754, 2
    %vm756 = vcmp.eq.s32.totalorder %v754, 0
    %v757 = vxor.u32 %v751, 2147483648
    %v758 = vsel %vm756, %v750, %v757
    %vm759 = vcmp.eq.s32.totalorder %v754, 2
    %v760 = vxor.u32 %v750, 2147483648
    %v761 = vsel %vm759, %v760, %v751
    %v762 = vsel %vm755, %v758, %v761
    %v763 = vsel %vm752, nan, %v762
    %v764 = vand.u32 2147483647, %v201
    %vm765 = vcmp.le.f32.partialorder %v764, 0.7853982
    %vm766 = vcmp.lt.s32.totalorder %v201, 0
    %v767 = vand.u32 %v201, 2139095040
    %v768 = vshrl.u32 %v767, 23
    %v769 = vsub.s32 %v768, 127
    %v770 = vand.u32 2147483647, %v201
    %v771 = vand.u32 %v770, 8388607
    %v772 = vor.u32 %v771, 8388608
    %v773 = vsub.s32 0, %v772
    %v774 = vadd.s32 %v769, 1
    %vm775 = vcmp.gt.s32.totalorder %v774, 0
    %v776 = vsel %vm775, %v774, 0
    %v777 = vshrl.u32 %v776, 5
    %v778 = vand.u32 %v776, 31
    %v779 = vsub.s32 32, %v778
    %v780 = vshrl.u32 683565275, %v779
    %v781 = vshll.u32 683565275, %v778
    %v782 = vshrl.u32 2475754826, %v779
    %v783 = vor.u32 %v781, %v782
    %v784 = vshll.u32 2475754826, %v778
    %v785 = vshrl.u32 2131351028, %v779
    %v786 = vor.u32 %v784, %v785
    %v787 = vshll.u32 2131351028, %v778
    %v788 = vshrl.u32 2102212464, %v779
    %v789 = vor.u32 %v787, %v788
    %v790 = vshll.u32 2102212464, %v778
    %v791 = vshrl.u32 920167782, %v779
    %v792 = vor.u32 %v790, %v791
    %v793 = vshll.u32 920167782, %v778
    %v794 = vshrl.u32 1326507024, %v779
    %v795 = vor.u32 %v793, %v794
    %vm796 = vcmp.lt.s32.totalorder %v777, 1
    %vm797 = vcmp.lt.s32.totalorder %v777, 2
    %vm798 = vcmp.lt.s32.totalorder %v777, 3
    %vm799 = vcmp.lt.s32.totalorder %v777, 4
    %v800 = vsel %vm796, %v780, %v783
    %v801 = vsel %vm799, %v789, 2102212464
    %v802 = vsel %vm798, %v786, %v801
    %v803 = vsel %vm797, %v800, %v802
    %v804 = vsel %vm796, %v783, %v786
    %v805 = vsel %vm799, %v792, 920167782
    %v806 = vsel %vm798, %v789, %v805
    %v807 = vsel %vm797, %v804, %v806
    %v808 = vsel %vm796, %v786, %v789
    %v809 = vsel %vm799, %v795, 1326507024
    %v810 = vsel %vm798, %v792, %v809
    %v811 = vsel %vm797, %v808, %v810
    %v812 = vshll.u32 %v772, 8
    %v813 = vmul.u32.u64.compose %v812, %v811
    %v814 = vextract.low.u32 %v813
    %v815 = vextract.high.u32 %v813
    %v816 = vmul.u32.u64.compose %v812, %v807
    %v817 = vextract.low.u32 %v816
    %v818 = vextract.high.u32 %v816
    %v819 = vmul.u32 %v812, %v803
    %v820 = vadd.s32 %v815, %v817
    %vm821 = vc.u32 %v815, %v817
    %v822 = vadd.s32 %v818, 1
    %v823 = vsel %vm821, %v822, %v818
    %v824 = vadd.s32 %v819, %v823
    %v825 = vadd.s32 %v824, 536870912
    %v826 = vshrl.u32 %v825, 30
    %v827 = vshll.u32 %v826, 30
    %v828 = vsub.s32 %v824, %v827
    %vm829 = vcmp.lt.s32.totalorder %v828, 0
    %v830 = vsub.s32 0, %v828
    %v831 = vsel %vm829, %v830, %v828
    %v832 = vclz %v831
    %v833 = vsub.s32 %v832, 2
    %vm834 = vcmp.gt.s32.totalorder 0, %v833
    %v835 = vsel %vm834, 0, %v833
    %v836 = vsub.s32 32, %v835
    %v837 = vshll.u32 %v828, %v835
    %v838 = vshrl.u32 %v820, %v836
    %v839 = vor.u32 %v837, %v838
    %v840 = vsub.s32 4294967266, %v835
    %v841 = vadd.s32 %v840, 127
    %v842 = vshll.u32 %v841, 23
    %v843 = vor.u32 4788187, %v842
    %v844 = vand.u32 2147483647, %v843
    %v846 = vcvt.s32.f32 %v839
    %v847 = vmul.f32 %v846, %v844
    %v848 = vxor.u32 %v847, 2147483648
    %v849 = vsel %vm766, %v848, %v847
    %v850 = vsub.s32 4, %v826
    %v851 = vsel %vm766, %v850, %v826
    %v852 = vsel %vm765, %v201, %v849
    %v853 = vsel %vm765, 0, %v851
    %v854 = vcosq.f32.pop %v852
    %v855 = vsinq.f32.pop %v852
    %vm856 = vweird.f32 %v201
    %v857 = vadd.s32 %v853, 3
    %v858 = vand.u32 %v857, 3
    %vm859 = vcmp.lt.s32.totalorder %v858, 2
    %vm860 = vcmp.eq.s32.totalorder %v858, 0
    %v861 = vxor.u32 %v855, 2147483648
    %v862 = vsel %vm860, %v854, %v861
    %vm863 = vcmp.eq.s32.totalorder %v858, 2
    %v864 = vxor.u32 %v854, 2147483648
    %v865 = vsel %vm863, %v864, %v855
    %v866 = vsel %vm859, %v862, %v865
    %v867 = vsel %vm856, nan, %v866
    %v868 = vand.u32 2147483647, %v202
    %vm869 = vcmp.le.f32.partialorder %v868, 0.7853982
    %vm870 = vcmp.lt.s32.totalorder %v202, 0
    %v871 = vand.u32 %v202, 2139095040
    %v872 = vshrl.u32 %v871, 23
    %v873 = vsub.s32 %v872, 127
    %v874 = vand.u32 2147483647, %v202
    %v875 = vand.u32 %v874, 8388607
    %v876 = vor.u32 %v875, 8388608
    %v877 = vsub.s32 0, %v876
    %v878 = vadd.s32 %v873, 1
    %vm879 = vcmp.gt.s32.totalorder %v878, 0
    %v880 = vsel %vm879, %v878, 0
    %v881 = vshrl.u32 %v880, 5
    %v882 = vand.u32 %v880, 31
    %v883 = vsub.s32 32, %v882
    %v884 = vshrl.u32 683565275, %v883
    %v885 = vshll.u32 683565275, %v882
    %v886 = vshrl.u32 2475754826, %v883
    %v887 = vor.u32 %v885, %v886
    %v888 = vshll.u32 2475754826, %v882
    %v889 = vshrl.u32 2131351028, %v883
    %v890 = vor.u32 %v888, %v889
    %v891 = vshll.u32 2131351028, %v882
    %v892 = vshrl.u32 2102212464, %v883
    %v893 = vor.u32 %v891, %v892
    %v894 = vshll.u32 2102212464, %v882
    %v895 = vshrl.u32 920167782, %v883
    %v896 = vor.u32 %v894, %v895
    %v897 = vshll.u32 920167782, %v882
    %v898 = vshrl.u32 1326507024, %v883
    %v899 = vor.u32 %v897, %v898
    %vm900 = vcmp.lt.s32.totalorder %v881, 1
    %vm901 = vcmp.lt.s32.totalorder %v881, 2
    %vm902 = vcmp.lt.s32.totalorder %v881, 3
    %vm903 = vcmp.lt.s32.totalorder %v881, 4
    %v904 = vsel %vm900, %v884, %v887
    %v905 = vsel %vm903, %v893, 2102212464
    %v906 = vsel %vm902, %v890, %v905
    %v907 = vsel %vm901, %v904, %v906
    %v908 = vsel %vm900, %v887, %v890
    %v909 = vsel %vm903, %v896, 920167782
    %v910 = vsel %vm902, %v893, %v909
    %v911 = vsel %vm901, %v908, %v910
    %v912 = vsel %vm900, %v890, %v893
    %v913 = vsel %vm903, %v899, 1326507024
    %v914 = vsel %vm902, %v896, %v913
    %v915 = vsel %vm901, %v912, %v914
    %v916 = vshll.u32 %v876, 8
    %v917 = vmul.u32.u64.compose %v916, %v915
    %v918 = vextract.low.u32 %v917
    %v919 = vextract.high.u32 %v917
    %v920 = vmul.u32.u64.compose %v916, %v911
    %v921 = vextract.low.u32 %v920
    %v922 = vextract.high.u32 %v920
    %v923 = vmul.u32 %v916, %v907
    %v924 = vadd.s32 %v919, %v921
    %vm925 = vc.u32 %v919, %v921
    %v926 = vadd.s32 %v922, 1
    %v927 = vsel %vm925, %v926, %v922
    %v928 = vadd.s32 %v923, %v927
    %v929 = vadd.s32 %v928, 536870912
    %v930 = vshrl.u32 %v929, 30
    %v931 = vshll.u32 %v930, 30
    %v932 = vsub.s32 %v928, %v931
    %vm933 = vcmp.lt.s32.totalorder %v932, 0
    %v934 = vsub.s32 0, %v932
    %v935 = vsel %vm933, %v934, %v932
    %v936 = vclz %v935
    %v937 = vsub.s32 %v936, 2
    %vm938 = vcmp.gt.s32.totalorder 0, %v937
    %v939 = vsel %vm938, 0, %v937
    %v940 = vsub.s32 32, %v939
    %v941 = vshll.u32 %v932, %v939
    %v942 = vshrl.u32 %v924, %v940
    %v943 = vor.u32 %v941, %v942
    %v944 = vsub.s32 4294967266, %v939
    %v945 = vadd.s32 %v944, 127
    %v946 = vshll.u32 %v945, 23
    %v947 = vor.u32 4788187, %v946
    %v948 = vand.u32 2147483647, %v947
    %v950 = vcvt.s32.f32 %v943
    %v951 = vmul.f32 %v950, %v948
    %v952 = vxor.u32 %v951, 2147483648
    %v953 = vsel %vm870, %v952, %v951
    %v954 = vsub.s32 4, %v930
    %v955 = vsel %vm870, %v954, %v930
    %v956 = vsel %vm869, %v202, %v953
    %v957 = vsel %vm869, 0, %v955
    %v958 = vcosq.f32.pop %v956
    %v959 = vsinq.f32.pop %v956
    %vm960 = vweird.f32 %v202
    %v961 = vadd.s32 %v957, 3
    %v962 = vand.u32 %v961, 3
    %vm963 = vcmp.lt.s32.totalorder %v962, 2
    %vm964 = vcmp.eq.s32.totalorder %v962, 0
    %v965 = vxor.u32 %v959, 2147483648
    %v966 = vsel %vm964, %v958, %v965
    %vm967 = vcmp.eq.s32.totalorder %v962, 2
    %v968 = vxor.u32 %v958, 2147483648
    %v969 = vsel %vm967, %v968, %v959
    %v970 = vsel %vm963, %v966, %v969
    %v971 = vsel %vm960, nan, %v970
    %v972 = vand.u32 2147483647, %v203
    %vm973 = vcmp.le.f32.partialorder %v972, 0.7853982
    %vm974 = vcmp.lt.s32.totalorder %v203, 0
    %v975 = vand.u32 %v203, 2139095040
    %v976 = vshrl.u32 %v975, 23
    %v977 = vsub.s32 %v976, 127
    %v978 = vand.u32 2147483647, %v203
    %v979 = vand.u32 %v978, 8388607
    %v980 = vor.u32 %v979, 8388608
    %v981 = vsub.s32 0, %v980
    %v982 = vadd.s32 %v977, 1
    %vm983 = vcmp.gt.s32.totalorder %v982, 0
    %v984 = vsel %vm983, %v982, 0
    %v985 = vshrl.u32 %v984, 5
    %v986 = vand.u32 %v984, 31
    %v987 = vsub.s32 32, %v986
    %v988 = vshrl.u32 683565275, %v987
    %v989 = vshll.u32 683565275, %v986
    %v990 = vshrl.u32 2475754826, %v987
    %v991 = vor.u32 %v989, %v990
    %v992 = vshll.u32 2475754826, %v986
    %v993 = vshrl.u32 2131351028, %v987
    %v994 = vor.u32 %v992, %v993
    %v995 = vshll.u32 2131351028, %v986
    %v996 = vshrl.u32 2102212464, %v987
    %v997 = vor.u32 %v995, %v996
    %v998 = vshll.u32 2102212464, %v986
    %v999 = vshrl.u32 920167782, %v987
    %v1000 = vor.u32 %v998, %v999
    %v1001 = vshll.u32 920167782, %v986
    %v1002 = vshrl.u32 1326507024, %v987
    %v1003 = vor.u32 %v1001, %v1002
    %vm1004 = vcmp.lt.s32.totalorder %v985, 1
    %vm1005 = vcmp.lt.s32.totalorder %v985, 2
    %vm1006 = vcmp.lt.s32.totalorder %v985, 3
    %vm1007 = vcmp.lt.s32.totalorder %v985, 4
    %v1008 = vsel %vm1004, %v988, %v991
    %v1009 = vsel %vm1007, %v997, 2102212464
    %v1010 = vsel %vm1006, %v994, %v1009
    %v1011 = vsel %vm1005, %v1008, %v1010
    %v1012 = vsel %vm1004, %v991, %v994
    %v1013 = vsel %vm1007, %v1000, 920167782
    %v1014 = vsel %vm1006, %v997, %v1013
    %v1015 = vsel %vm1005, %v1012, %v1014
    %v1016 = vsel %vm1004, %v994, %v997
    %v1017 = vsel %vm1007, %v1003, 1326507024
    %v1018 = vsel %vm1006, %v1000, %v1017
    %v1019 = vsel %vm1005, %v1016, %v1018
    %v1020 = vshll.u32 %v980, 8
    %v1021 = vmul.u32.u64.compose %v1020, %v1019
    %v1022 = vextract.low.u32 %v1021
    %v1023 = vextract.high.u32 %v1021
    %v1024 = vmul.u32.u64.compose %v1020, %v1015
    %v1025 = vextract.low.u32 %v1024
    %v1026 = vextract.high.u32 %v1024
    %v1027 = vmul.u32 %v1020, %v1011
    %v1028 = vadd.s32 %v1023, %v1025
    %vm1029 = vc.u32 %v1023, %v1025
    %v1030 = vadd.s32 %v1026, 1
    %v1031 = vsel %vm1029, %v1030, %v1026
    %v1032 = vadd.s32 %v1027, %v1031
    %v1033 = vadd.s32 %v1032, 536870912
    %v1034 = vshrl.u32 %v1033, 30
    %v1035 = vshll.u32 %v1034, 30
    %v1036 = vsub.s32 %v1032, %v1035
    %vm1037 = vcmp.lt.s32.totalorder %v1036, 0
    %v1038 = vsub.s32 0, %v1036
    %v1039 = vsel %vm1037, %v1038, %v1036
    %v1040 = vclz %v1039
    %v1041 = vsub.s32 %v1040, 2
    %vm1042 = vcmp.gt.s32.totalorder 0, %v1041
    %v1043 = vsel %vm1042, 0, %v1041
    %v1044 = vsub.s32 32, %v1043
    %v1045 = vshll.u32 %v1036, %v1043
    %v1046 = vshrl.u32 %v1028, %v1044
    %v1047 = vor.u32 %v1045, %v1046
    %v1048 = vsub.s32 4294967266, %v1043
    %v1049 = vadd.s32 %v1048, 127
    %v1050 = vshll.u32 %v1049, 23
    %v1051 = vor.u32 4788187, %v1050
    %v1052 = vand.u32 2147483647, %v1051
    %v1054 = vcvt.s32.f32 %v1047
    %v1055 = vmul.f32 %v1054, %v1052
    %v1056 = vxor.u32 %v1055, 2147483648
    %v1057 = vsel %vm974, %v1056, %v1055
    %v1058 = vsub.s32 4, %v1034
    %v1059 = vsel %vm974, %v1058, %v1034
    %v1060 = vsel %vm973, %v203, %v1057
    %v1061 = vsel %vm973, 0, %v1059
    %v1062 = vcosq.f32.pop %v1060
    %v1063 = vsinq.f32.pop %v1060
    %vm1064 = vweird.f32 %v203
    %v1065 = vadd.s32 %v1061, 3
    %v1066 = vand.u32 %v1065, 3
    %vm1067 = vcmp.lt.s32.totalorder %v1066, 2
    %vm1068 = vcmp.eq.s32.totalorder %v1066, 0
    %v1069 = vxor.u32 %v1063, 2147483648
    %v1070 = vsel %vm1068, %v1062, %v1069
    %vm1071 = vcmp.eq.s32.totalorder %v1066, 2
    %v1072 = vxor.u32 %v1062, 2147483648
    %v1073 = vsel %vm1071, %v1072, %v1063
    %v1074 = vsel %vm1067, %v1070, %v1073
    %v1075 = vsel %vm1064, nan, %v1074
    %v1076 = vmul.f32 %v222, %v763
    %v1077 = vmul.f32 %v229, %v867
    %v1078 = vmul.f32 %v236, %v971
    %v1079 = vmul.f32 %v243, %v1075
    %v1080 = vld [vmem:[#allocation3] sm:$0xff]
    %v1081 = vld [vmem:[#allocation3 + $0x8] sm:$0xff]
    %v1082 = vld [vmem:[#allocation3 + $0x10] sm:$0xff]
    %v1083 = vld [vmem:[#allocation3 + $0x18] sm:$0xff]
    %v1084 = vadd.f32 %v1080, %v656
    %v1085 = vadd.f32 %v1081, %v657
    %v1086 = vadd.f32 %v1082, %v658
    %v1087 = vadd.f32 %v1083, %v659
    %1088 = vst [vmem:[#allocation6] sm:$0xff] %v1084
    %1089 = vst [vmem:[#allocation6 + $0x8] sm:$0xff] %v1085
    %1090 = vst [vmem:[#allocation6 + $0x10] sm:$0xff] %v1086
    %1091 = vst [vmem:[#allocation6 + $0x18] sm:$0xff] %v1087
    %v1092 = vld [vmem:[#allocation3 + $0x20] sm:$0xff]
    %v1093 = vld [vmem:[#allocation3 + $0x28] sm:$0xff]
    %v1094 = vld [vmem:[#allocation3 + $0x30] sm:$0xff]
    %v1095 = vld [vmem:[#allocation3 + $0x38] sm:$0xff]
    %v1096 = vadd.f32 %v1092, %v1076
    %v1097 = vadd.f32 %v1093, %v1077
    %v1098 = vadd.f32 %v1094, %v1078
    %v1099 = vadd.f32 %v1095, %v1079
    %1100 = vst [vmem:[#allocation6 + $0x20] sm:$0xff] %v1096
    %1101 = vst [vmem:[#allocation6 + $0x28] sm:$0xff] %v1097
    %1102 = vst [vmem:[#allocation6 + $0x30] sm:$0xff] %v1098
    %1103 = vst [vmem:[#allocation6 + $0x38] sm:$0xff] %v1099
    // Predicated region
    $region14: #{tpu_custom_call.1} parent=1 // pred_check
      _
    $region15: #{tpu_custom_call.1} parent=1 // pred_check_branch
      %1105 = sbr.rel (0) target = $region17
    $region16: #{tpu_custom_call.1} parent=1 // pred_region
      %s1107 = ssub.s32 1024, 1024
      %1108 = vsyncadd [#allocation5], %s1107
      %s1109 = sshll.u32 [#allocation6], 4
      %s1110 = int_to_ptr.vmem [resolvable:$true] %s1109
      %1115 = dma.vmem_to_hbm [thread:$0]  %s1110, 1024, %s2, [#allocation5], 512, 512, 32
    $region17: #{tpu_custom_call.1} parent=1 // pred_fallthru
      _
    // Predicated region
    $region18: #{tpu_custom_call.1} parent=1 // pred_check
      _
    $region19: #{tpu_custom_call.1} parent=1 // pred_check_branch
      %1117 = sbr.rel (0) target = $region21
    $region20: #{tpu_custom_call.1} parent=1 // pred_region
      %1118 = dma.done [#allocation5], 1024
    $region21: #{tpu_custom_call.1} parent=1 // pred_fallthru
      _
    %1119 = vsyncpa [#allocation4], 1
    %1120 = vsyncpa [#allocation5], 1

</llo_original>
